<compile_context>
chip_gen: v7x
topology: tpu7x:2x2x1
jax: 0.10.0
libtpu: 0.0.40
codegen_flags: <defaults>
</compile_context>

<pallas_src>
import jax
import jax.numpy as jnp
from jax.experimental import pallas as pl
from jax.experimental.pallas import tpu as pltpu

LANE = 128          # vreg lane width (last dim)
BATCH_ALIGN = 16    # bf16 sublane pack (also valid for f32 blocks)
MXU_M = 256         # MXU M-dimension on v6e/v7x
MAX_BATCH_TILE = 512


def _round_up(n, m):
    return ((n + m - 1) // m) * m


def _cdiv(a, b):
    return (a + b - 1) // b


def _vmem_ceiling_bytes():
    """~75% of physical VMEM: ~48 MiB on v7x (64 MiB), ~96 MiB on v5e/v6e (128 MiB)."""
    try:
        cap = pltpu.get_tpu_info().vmem_capacity_bytes
    except Exception:
        cap = 64 * 1024 * 1024  # conservative default: assume v7x
    return int(cap) * 3 // 4


def _choose_batch_tile(B, max_batch_tile=MAX_BATCH_TILE):
    n = _cdiv(B, max_batch_tile)
    # v7x has 2 TensorCores: once there is enough work, split the "parallel"
    # batch axis into >= 2 grid steps instead of running grid=(1,).
    if n == 1 and B > MXU_M:
        n = 2
    per = _cdiv(B, n)
    align = MXU_M if per >= MXU_M else BATCH_ALIGN
    tb = _round_up(per, align)
    n = _cdiv(B, tb)
    return tb, n


def _footprint_bytes(TB, Kp, Hp, Op, weight_bufs):
    bf16, f32 = 2, 4
    weights = bf16 * (Kp * Hp + Hp * Hp + Hp * Op) * weight_bufs
    biases = f32 * (2 * Hp + Op) * weight_bufs
    io = 2 * (bf16 * TB * Kp + f32 * TB * Op)                 # double-buffered x / out tiles
    interm = f32 * TB * (2 * Hp + Op) + bf16 * TB * 2 * Hp    # h1/h2/out f32 + bf16 re-casts
    return weights + biases + io + interm


def simple_nn_kernel(x_ref, w1_ref, b1_ref, w2_ref, b2_ref, w3_ref, b3_ref, o_ref):
    # fc1:  h1 = x @ W1 + b1        (no ReLU after fc1 -- matches the PyTorch forward)
    h1 = jnp.dot(x_ref[...], w1_ref[...],
                 preferred_element_type=jnp.float32) + b1_ref[...]
    # ml1 + mr1:  h2 = relu(h1 @ W2 + b2)   (bf16 operands, f32 accumulate)
    h2 = jnp.dot(h1.astype(w2_ref.dtype), w2_ref[...],
                 preferred_element_type=jnp.float32) + b2_ref[...]
    h2 = jnp.maximum(h2, 0.0)
    # fc2:  out = h2 @ W3 + b3
    out = jnp.dot(h2.astype(w3_ref.dtype), w3_ref[...],
                  preferred_element_type=jnp.float32) + b3_ref[...]
    o_ref[...] = out.astype(o_ref.dtype)


def simple_nn_forward(x, w1, b1, w2, b2, w3, b3, *, max_batch_tile=MAX_BATCH_TILE):
    """x: (B, K) f32; w*: (in, out) (= PyTorch weight.T); b*: (1, out). Returns (B, O) f32."""
    B, K = x.shape
    H = w1.shape[1]
    O = w3.shape[1]

    # Lane-dense feature padding (numerically exact: padded weight rows/cols and
    # bias lanes are 0, ReLU(0) = 0, padded batch rows are sliced off).
    # TODO(synk): in the mem-bound small-K regime, skip the K padding of x and use a
    # full-K block (full-dim blocks are exempt from the 128 rule) to cut x read traffic.
    Kp = _round_up(K, LANE)
    Hp = _round_up(H, LANE)
    Op = _round_up(O, LANE)

    vmem_ceiling = _vmem_ceiling_bytes()
    TB, n_tiles = _choose_batch_tile(B, max_batch_tile)
    # Shrink the batch tile until the (conservatively double-buffered) footprint fits.
    while _footprint_bytes(TB, Kp, Hp, Op, weight_bufs=2) > vmem_ceiling and TB > BATCH_ALIGN:
        TB = max(BATCH_ALIGN, _round_up(TB // 2, BATCH_ALIGN))
        n_tiles = _cdiv(B, TB)
    if _footprint_bytes(TB, Kp, Hp, Op, weight_bufs=2) > vmem_ceiling:
        # TODO(synk): add a hidden-dim ("arbitrary") reduction grid axis with a VMEM
        # accumulator so huge H degrades gracefully instead of failing weight residency.
        raise NotImplementedError(
            f"resident weights ({Kp}x{Hp}, {Hp}x{Hp}, {Hp}x{Op}) do not fit in VMEM")
    Bp = n_tiles * TB

    def pad2(a, rows, cols, dtype):
        a = a.astype(dtype)
        return jnp.pad(a, ((0, rows - a.shape[0]), (0, cols - a.shape[1])))

    # bf16 matmul operands (MXU-native); f32 biases added to the f32 accumulator.
    xp = pad2(x, Bp, Kp, jnp.bfloat16)
    w1p, b1p = pad2(w1, Kp, Hp, jnp.bfloat16), pad2(b1, 1, Hp, jnp.float32)
    w2p, b2p = pad2(w2, Hp, Hp, jnp.bfloat16), pad2(b2, 1, Hp, jnp.float32)
    w3p, b3p = pad2(w3, Hp, Op, jnp.bfloat16), pad2(b3, 1, Op, jnp.float32)

    flops = 2 * Bp * (Kp * Hp + Hp * Hp + Hp * Op)
    bytes_accessed = (2 * (Bp * Kp + Kp * Hp + Hp * Hp + Hp * Op)   # bf16 x + weights
                      + 4 * (2 * Hp + Op)                           # f32 biases
                      + 4 * Bp * Op)                                # f32 output
    cost = pl.CostEstimate(flops=flops, transcendentals=0, bytes_accessed=bytes_accessed)

    def run(single_buffer_weights):
        def resident(shape):
            # Same block every grid step -> DMA'd once, stays in VMEM.  Single-buffer
            # when supported so the resident params don't pay 2x VMEM (matters on v7x).
            if single_buffer_weights:
                return pl.BlockSpec(shape, lambda i: (0, 0),
                                    pipeline_mode=pl.Buffered(1))
            return pl.BlockSpec(shape, lambda i: (0, 0))

        weight_bufs = 1 if single_buffer_weights else 2
        footprint = _footprint_bytes(TB, Kp, Hp, Op, weight_bufs)
        vmem_limit = int(min(vmem_ceiling, max(16 * 1024 * 1024, 2 * footprint)))

        return pl.pallas_call(
            simple_nn_kernel,
            out_shape=jax.ShapeDtypeStruct((Bp, Op), jnp.float32),
            grid=(n_tiles,),
            in_specs=[
                pl.BlockSpec((TB, Kp), lambda i: (i, 0)),   # x: tiled over batch
                resident(w1p.shape), resident(b1p.shape),
                resident(w2p.shape), resident(b2p.shape),
                resident(w3p.shape), resident(b3p.shape),
            ],
            out_specs=pl.BlockSpec((TB, Op), lambda i: (i, 0)),   # lane-dense store
            compiler_params=pltpu.CompilerParams(
                dimension_semantics=("parallel",),   # batch axis -> both TCs on v7x
                vmem_limit_bytes=vmem_limit,
            ),
            cost_estimate=cost,
        )(xp, w1p, b1p, w2p, b2p, w3p, b3p)

    try:
        out_padded = run(single_buffer_weights=True)
    except Exception:
        # pipeline_mode=pl.Buffered(1) not supported on this jax version/backend:
        # fall back to default double-buffered resident weights (correctness identical).
        out_padded = run(single_buffer_weights=False)

    return out_padded[:B, :O]


def init_params(key, input_size, hidden_size, output_size):
    # Deterministic synthetic init (PyTorch-style uniform(-1/sqrt(fan_in), 1/sqrt(fan_in))).
    keys = jax.random.split(key, 6)

    def linear(kw, kb, fan_in, fan_out):
        bound = 1.0 / jnp.sqrt(fan_in)
        # weight stored already transposed: (in, out)
        w = jax.random.uniform(kw, (fan_in, fan_out), jnp.float32, -bound, bound)
        b = jax.random.uniform(kb, (1, fan_out), jnp.float32, -bound, bound)
        return w, b

    w1, b1 = linear(keys[0], keys[1], input_size, hidden_size)   # fc1
    w2, b2 = linear(keys[2], keys[3], hidden_size, hidden_size)  # ml1
    w3, b3 = linear(keys[4], keys[5], hidden_size, output_size)  # fc2
    return w1, b1, w2, b2, w3, b3


def _reference(x, w1, b1, w2, b2, w3, b3):
    h1 = x @ w1 + b1
    h2 = jnp.maximum(h1 @ w2 + b2, 0.0)
    return h2 @ w3 + b3


if __name__ == "__main__":
    key = jax.random.PRNGKey(0)
    batch, input_size, hidden_size, output_size = 8, 16, 32, 8

    kx, kp, kx2, kx3 = jax.random.split(key, 4)
    params = init_params(kp, input_size, hidden_size, output_size)

    # Primary check (single batch tile).  bf16 operands / f32 accumulation -> ~1e-2 tol.
    x = jax.random.normal(kx, (batch, input_size), jnp.float32)
    out = jax.block_until_ready(simple_nn_forward(x, *params))
    ref = _reference(x, *params)
    assert out.shape == (batch, output_size)
    assert jnp.allclose(out, ref, atol=2e-2, rtol=2e-2)

    # Ragged batch: exercises the zero-padding + slice path.
    x2 = jax.random.normal(kx2, (batch + 2, input_size), jnp.float32)
    out2 = jax.block_until_ready(simple_nn_forward(x2, *params))
    assert out2.shape == (batch + 2, output_size)
    assert jnp.allclose(out2, _reference(x2, *params), atol=2e-2, rtol=2e-2)

    # Larger batch: exercises the multi-tile (>= 2 grid steps / dual-TC parallel) path.
    x3 = jax.random.normal(kx3, (300, input_size), jnp.float32)
    out3 = jax.block_until_ready(simple_nn_forward(x3, *params))
    assert out3.shape == (300, output_size)
    assert jnp.allclose(out3, _reference(x3, *params), atol=2e-2, rtol=2e-2)

    print("KERNEL_OK")
</pallas_src>

<mosaic_0001>
module attributes {stable_mosaic.version = 11 : i64} {
  func.func @simple_nn_kernel(%arg0: i32, %arg1: memref<16x128xbf16, #tpu.memory_space<vmem>>, %arg2: memref<128x128xbf16, #tpu.memory_space<vmem>>, %arg3: memref<1x128xf32, #tpu.memory_space<vmem>>, %arg4: memref<128x128xbf16, #tpu.memory_space<vmem>>, %arg5: memref<1x128xf32, #tpu.memory_space<vmem>>, %arg6: memref<128x128xbf16, #tpu.memory_space<vmem>>, %arg7: memref<1x128xf32, #tpu.memory_space<vmem>>, %arg8: memref<16x128xf32, #tpu.memory_space<vmem>>) attributes {dimension_semantics = [#tpu.dimension_semantics<parallel>], iteration_bounds = array<i64: 1>, scalar_prefetch = 0 : i64, scratch_operands = 0 : i64, tpu.core_type = #tpu.core_type<tc>, window_params = [{transform_indices = @transform_0, window_bounds = array<i64: 16, 128>}, {pipeline_mode = #tpu.pipeline_mode<synchronous>, transform_indices = @transform_1, window_bounds = array<i64: 128, 128>}, {pipeline_mode = #tpu.pipeline_mode<synchronous>, transform_indices = @transform_2, window_bounds = array<i64: 1, 128>}, {pipeline_mode = #tpu.pipeline_mode<synchronous>, transform_indices = @transform_3, window_bounds = array<i64: 128, 128>}, {pipeline_mode = #tpu.pipeline_mode<synchronous>, transform_indices = @transform_4, window_bounds = array<i64: 1, 128>}, {pipeline_mode = #tpu.pipeline_mode<synchronous>, transform_indices = @transform_5, window_bounds = array<i64: 128, 128>}, {pipeline_mode = #tpu.pipeline_mode<synchronous>, transform_indices = @transform_6, window_bounds = array<i64: 1, 128>}, {transform_indices = @transform_7, window_bounds = array<i64: 16, 128>}]} {
    %c0 = arith.constant 0 : index
    %c0_0 = arith.constant 0 : index
    %0 = vector.load %arg1[%c0, %c0_0] : memref<16x128xbf16, #tpu.memory_space<vmem>>, vector<16x128xbf16>
    %c0_1 = arith.constant 0 : index
    %c0_2 = arith.constant 0 : index
    %1 = vector.load %arg2[%c0_1, %c0_2] : memref<128x128xbf16, #tpu.memory_space<vmem>>, vector<128x128xbf16>
    %cst = arith.constant dense<0.000000e+00> : vector<16x128xf32>
    %2 = tpu.matmul %0, %1, %cst {dimension_numbers = #tpu.dot_dimension_numbers<[1], [0], [0], [1], [0, 0, 1, 1], [], []>} : vector<16x128xbf16>, vector<128x128xbf16>, vector<16x128xf32> -> vector<16x128xf32>
    %c0_3 = arith.constant 0 : index
    %c0_4 = arith.constant 0 : index
    %3 = vector.load %arg3[%c0_3, %c0_4] : memref<1x128xf32, #tpu.memory_space<vmem>>, vector<1x128xf32>
    %4 = vector.broadcast %3 : vector<1x128xf32> to vector<16x128xf32>
    %5 = arith.addf %2, %4 : vector<16x128xf32>
    %6 = arith.truncf %5 : vector<16x128xf32> to vector<16x128xbf16>
    %c0_5 = arith.constant 0 : index
    %c0_6 = arith.constant 0 : index
    %7 = vector.load %arg4[%c0_5, %c0_6] : memref<128x128xbf16, #tpu.memory_space<vmem>>, vector<128x128xbf16>
    %cst_7 = arith.constant dense<0.000000e+00> : vector<16x128xf32>
    %8 = tpu.matmul %6, %7, %cst_7 {dimension_numbers = #tpu.dot_dimension_numbers<[1], [0], [0], [1], [0, 0, 1, 1], [], []>} : vector<16x128xbf16>, vector<128x128xbf16>, vector<16x128xf32> -> vector<16x128xf32>
    %c0_8 = arith.constant 0 : index
    %c0_9 = arith.constant 0 : index
    %9 = vector.load %arg5[%c0_8, %c0_9] : memref<1x128xf32, #tpu.memory_space<vmem>>, vector<1x128xf32>
    %10 = vector.broadcast %9 : vector<1x128xf32> to vector<16x128xf32>
    %11 = arith.addf %8, %10 : vector<16x128xf32>
    %cst_10 = arith.constant 0.000000e+00 : f32
    %12 = vector.broadcast %cst_10 : f32 to vector<16x128xf32>
    %13 = arith.maximumf %11, %12 : vector<16x128xf32>
    %14 = arith.truncf %13 : vector<16x128xf32> to vector<16x128xbf16>
    %c0_11 = arith.constant 0 : index
    %c0_12 = arith.constant 0 : index
    %15 = vector.load %arg6[%c0_11, %c0_12] : memref<128x128xbf16, #tpu.memory_space<vmem>>, vector<128x128xbf16>
    %cst_13 = arith.constant dense<0.000000e+00> : vector<16x128xf32>
    %16 = tpu.matmul %14, %15, %cst_13 {dimension_numbers = #tpu.dot_dimension_numbers<[1], [0], [0], [1], [0, 0, 1, 1], [], []>} : vector<16x128xbf16>, vector<128x128xbf16>, vector<16x128xf32> -> vector<16x128xf32>
    %c0_14 = arith.constant 0 : index
    %c0_15 = arith.constant 0 : index
    %17 = vector.load %arg7[%c0_14, %c0_15] : memref<1x128xf32, #tpu.memory_space<vmem>>, vector<1x128xf32>
    %18 = vector.broadcast %17 : vector<1x128xf32> to vector<16x128xf32>
    %19 = arith.addf %16, %18 : vector<16x128xf32>
    %c0_16 = arith.constant 0 : index
    %c0_17 = arith.constant 0 : index
    %20 = vector.load %arg8[%c0_16, %c0_17] : memref<16x128xf32, #tpu.memory_space<vmem>>, vector<16x128xf32>
    tpu.vector_store %arg8[%c0_16, %c0_17], %19 {strides = array<i32>} : memref<16x128xf32, #tpu.memory_space<vmem>>, vector<16x128xf32>,
    return
  }
  func.func @transform_0(%arg0: i32) -> (i32, i32) {
    %c0_i32 = arith.constant 0 : i32
    %c0_i32_0 = arith.constant 0 : i32
    return %arg0, %c0_i32 : i32, i32
  }
  func.func @transform_1(%arg0: i32) -> (i32, i32) {
    %c0_i32 = arith.constant 0 : i32
    %c0_i32_0 = arith.constant 0 : i32
    %c0_i32_1 = arith.constant 0 : i32
    return %c0_i32, %c0_i32_0 : i32, i32
  }
  func.func @transform_2(%arg0: i32) -> (i32, i32) {
    %c0_i32 = arith.constant 0 : i32
    %c0_i32_0 = arith.constant 0 : i32
    %c0_i32_1 = arith.constant 0 : i32
    return %c0_i32, %c0_i32_0 : i32, i32
  }
  func.func @transform_3(%arg0: i32) -> (i32, i32) {
    %c0_i32 = arith.constant 0 : i32
    %c0_i32_0 = arith.constant 0 : i32
    %c0_i32_1 = arith.constant 0 : i32
    return %c0_i32, %c0_i32_0 : i32, i32
  }
  func.func @transform_4(%arg0: i32) -> (i32, i32) {
    %c0_i32 = arith.constant 0 : i32
    %c0_i32_0 = arith.constant 0 : i32
    %c0_i32_1 = arith.constant 0 : i32
    return %c0_i32, %c0_i32_0 : i32, i32
  }
  func.func @transform_5(%arg0: i32) -> (i32, i32) {
    %c0_i32 = arith.constant 0 : i32
    %c0_i32_0 = arith.constant 0 : i32
    %c0_i32_1 = arith.constant 0 : i32
    return %c0_i32, %c0_i32_0 : i32, i32
  }
  func.func @transform_6(%arg0: i32) -> (i32, i32) {
    %c0_i32 = arith.constant 0 : i32
    %c0_i32_0 = arith.constant 0 : i32
    %c0_i32_1 = arith.constant 0 : i32
    return %c0_i32, %c0_i32_0 : i32, i32
  }
  func.func @transform_7(%arg0: i32) -> (i32, i32) {
    %c0_i32 = arith.constant 0 : i32
    %c0_i32_0 = arith.constant 0 : i32
    return %arg0, %c0_i32 : i32, i32
  }
}

module attributes {stable_mosaic.version = 11 : i64} {
  func.func @simple_nn_kernel(%arg0: i32, %arg1: memref<16x128xbf16, #tpu.memory_space<vmem>>, %arg2: memref<128x128xbf16, #tpu.memory_space<vmem>>, %arg3: memref<1x128xf32, #tpu.memory_space<vmem>>, %arg4: memref<128x128xbf16, #tpu.memory_space<vmem>>, %arg5: memref<1x128xf32, #tpu.memory_space<vmem>>, %arg6: memref<128x128xbf16, #tpu.memory_space<vmem>>, %arg7: memref<1x128xf32, #tpu.memory_space<vmem>>, %arg8: memref<16x128xf32, #tpu.memory_space<vmem>>) attributes {dimension_semantics = [#tpu.dimension_semantics<parallel>], iteration_bounds = array<i64: 1>, scalar_prefetch = 0 : i64, scratch_operands = 0 : i64, tpu.core_type = #tpu.core_type<tc>, window_params = [{transform_indices = @transform_0, window_bounds = array<i64: 16, 128>}, {pipeline_mode = #tpu.pipeline_mode<synchronous>, transform_indices = @transform_1, window_bounds = array<i64: 128, 128>}, {pipeline_mode = #tpu.pipeline_mode<synchronous>, transform_indices = @transform_2, window_bounds = array<i64: 1, 128>}, {pipeline_mode = #tpu.pipeline_mode<synchronous>, transform_indices = @transform_3, window_bounds = array<i64: 128, 128>}, {pipeline_mode = #tpu.pipeline_mode<synchronous>, transform_indices = @transform_4, window_bounds = array<i64: 1, 128>}, {pipeline_mode = #tpu.pipeline_mode<synchronous>, transform_indices = @transform_5, window_bounds = array<i64: 128, 128>}, {pipeline_mode = #tpu.pipeline_mode<synchronous>, transform_indices = @transform_6, window_bounds = array<i64: 1, 128>}, {transform_indices = @transform_7, window_bounds = array<i64: 16, 128>}]} {
    %c0 = arith.constant 0 : index
    %c0_0 = arith.constant 0 : index
    %0 = vector.load %arg1[%c0, %c0_0] : memref<16x128xbf16, #tpu.memory_space<vmem>>, vector<16x128xbf16>
    %c0_1 = arith.constant 0 : index
    %c0_2 = arith.constant 0 : index
    %1 = vector.load %arg2[%c0_1, %c0_2] : memref<128x128xbf16, #tpu.memory_space<vmem>>, vector<128x128xbf16>
    %cst = arith.constant dense<0.000000e+00> : vector<16x128xf32>
    %2 = tpu.matmul %0, %1, %cst {dimension_numbers = #tpu.dot_dimension_numbers<[1], [0], [0], [1], [0, 0, 1, 1], [], []>} : vector<16x128xbf16>, vector<128x128xbf16>, vector<16x128xf32> -> vector<16x128xf32>
    %c0_3 = arith.constant 0 : index
    %c0_4 = arith.constant 0 : index
    %3 = vector.load %arg3[%c0_3, %c0_4] : memref<1x128xf32, #tpu.memory_space<vmem>>, vector<1x128xf32>
    %4 = vector.broadcast %3 : vector<1x128xf32> to vector<16x128xf32>
    %5 = arith.addf %2, %4 : vector<16x128xf32>
    %6 = arith.truncf %5 : vector<16x128xf32> to vector<16x128xbf16>
    %c0_5 = arith.constant 0 : index
    %c0_6 = arith.constant 0 : index
    %7 = vector.load %arg4[%c0_5, %c0_6] : memref<128x128xbf16, #tpu.memory_space<vmem>>, vector<128x128xbf16>
    %cst_7 = arith.constant dense<0.000000e+00> : vector<16x128xf32>
    %8 = tpu.matmul %6, %7, %cst_7 {dimension_numbers = #tpu.dot_dimension_numbers<[1], [0], [0], [1], [0, 0, 1, 1], [], []>} : vector<16x128xbf16>, vector<128x128xbf16>, vector<16x128xf32> -> vector<16x128xf32>
    %c0_8 = arith.constant 0 : index
    %c0_9 = arith.constant 0 : index
    %9 = vector.load %arg5[%c0_8, %c0_9] : memref<1x128xf32, #tpu.memory_space<vmem>>, vector<1x128xf32>
    %10 = vector.broadcast %9 : vector<1x128xf32> to vector<16x128xf32>
    %11 = arith.addf %8, %10 : vector<16x128xf32>
    %cst_10 = arith.constant 0.000000e+00 : f32
    %12 = vector.broadcast %cst_10 : f32 to vector<16x128xf32>
    %13 = arith.maximumf %11, %12 : vector<16x128xf32>
    %14 = arith.truncf %13 : vector<16x128xf32> to vector<16x128xbf16>
    %c0_11 = arith.constant 0 : index
    %c0_12 = arith.constant 0 : index
    %15 = vector.load %arg6[%c0_11, %c0_12] : memref<128x128xbf16, #tpu.memory_space<vmem>>, vector<128x128xbf16>
    %cst_13 = arith.constant dense<0.000000e+00> : vector<16x128xf32>
    %16 = tpu.matmul %14, %15, %cst_13 {dimension_numbers = #tpu.dot_dimension_numbers<[1], [0], [0], [1], [0, 0, 1, 1], [], []>} : vector<16x128xbf16>, vector<128x128xbf16>, vector<16x128xf32> -> vector<16x128xf32>
    %c0_14 = arith.constant 0 : index
    %c0_15 = arith.constant 0 : index
    %17 = vector.load %arg7[%c0_14, %c0_15] : memref<1x128xf32, #tpu.memory_space<vmem>>, vector<1x128xf32>
    %18 = vector.broadcast %17 : vector<1x128xf32> to vector<16x128xf32>
    %19 = arith.addf %16, %18 : vector<16x128xf32>
    %c0_16 = arith.constant 0 : index
    %c0_17 = arith.constant 0 : index
    %20 = vector.load %arg8[%c0_16, %c0_17] : memref<16x128xf32, #tpu.memory_space<vmem>>, vector<16x128xf32>
    tpu.vector_store %arg8[%c0_16, %c0_17], %19 {strides = array<i32>} : memref<16x128xf32, #tpu.memory_space<vmem>>, vector<16x128xf32>,
    return
  }
  func.func @transform_0(%arg0: i32) -> (i32, i32) {
    %c0_i32 = arith.constant 0 : i32
    %c0_i32_0 = arith.constant 0 : i32
    return %arg0, %c0_i32 : i32, i32
  }
  func.func @transform_1(%arg0: i32) -> (i32, i32) {
    %c0_i32 = arith.constant 0 : i32
    %c0_i32_0 = arith.constant 0 : i32
    %c0_i32_1 = arith.constant 0 : i32
    return %c0_i32, %c0_i32_0 : i32, i32
  }
  func.func @transform_2(%arg0: i32) -> (i32, i32) {
    %c0_i32 = arith.constant 0 : i32
    %c0_i32_0 = arith.constant 0 : i32
    %c0_i32_1 = arith.constant 0 : i32
    return %c0_i32, %c0_i32_0 : i32, i32
  }
  func.func @transform_3(%arg0: i32) -> (i32, i32) {
    %c0_i32 = arith.constant 0 : i32
    %c0_i32_0 = arith.constant 0 : i32
    %c0_i32_1 = arith.constant 0 : i32
    return %c0_i32, %c0_i32_0 : i32, i32
  }
  func.func @transform_4(%arg0: i32) -> (i32, i32) {
    %c0_i32 = arith.constant 0 : i32
    %c0_i32_0 = arith.constant 0 : i32
    %c0_i32_1 = arith.constant 0 : i32
    return %c0_i32, %c0_i32_0 : i32, i32
  }
  func.func @transform_5(%arg0: i32) -> (i32, i32) {
    %c0_i32 = arith.constant 0 : i32
    %c0_i32_0 = arith.constant 0 : i32
    %c0_i32_1 = arith.constant 0 : i32
    return %c0_i32, %c0_i32_0 : i32, i32
  }
  func.func @transform_6(%arg0: i32) -> (i32, i32) {
    %c0_i32 = arith.constant 0 : i32
    %c0_i32_0 = arith.constant 0 : i32
    %c0_i32_1 = arith.constant 0 : i32
    return %c0_i32, %c0_i32_0 : i32, i32
  }
  func.func @transform_7(%arg0: i32) -> (i32, i32) {
    %c0_i32 = arith.constant 0 : i32
    %c0_i32_0 = arith.constant 0 : i32
    return %arg0, %c0_i32 : i32, i32
  }
}

</mosaic_0001>

<llo_original>
// kernel: tpu_custom_call.1
$region0: #{tpu_custom_call.1}
  #allocation0 [shape = 'u32[]', space=smem, size = 0x4, offset = 0x4, fixed_abs, tag = 'smem constant byte address 0x4 - core index']
  #allocation1 [shape = 'u32[144,128]{1,0:T(1,128)}', space=vmem, size = 0x12000, scoped, tag = 'internal scratch']
  %s0 = inlined_call_operand.hbm [shape: bf16[16,128], index: 0, kind: input, shape index: {}]
  %s1 = inlined_call_operand.hbm [shape: bf16[128,128], index: 1, kind: input, shape index: {}]
  %s2 = inlined_call_operand.vmem [shape: f32[1,128], index: 2, kind: input, shape index: {}]
  %s3 = inlined_call_operand.hbm [shape: bf16[128,128], index: 3, kind: input, shape index: {}]
  %s4 = inlined_call_operand.vmem [shape: f32[1,128], index: 4, kind: input, shape index: {}]
  %s5 = inlined_call_operand.hbm [shape: bf16[128,128], index: 5, kind: input, shape index: {}]
  %s6 = inlined_call_operand.vmem [shape: f32[1,128], index: 6, kind: input, shape index: {}]
  %s7 = inlined_call_operand.hbm [shape: f32[16,128], index: 7, kind: output, shape index: {}]
  %s8 = sld [smem:[#allocation0]]
  $region54: #{tpu_custom_call.1} parent=0
    _
  %s10 = ssub.s32 1, %s8
  %s11 = scalar_select 0, %s10, %s8
  $region1: #{tpu_custom_call.1} parent=0
    #allocation2 [shape = 'u8[4096]{0}', space=vmem, size = 0x1000, scoped, tag = 'input window, operand 0, single buffered']
    #allocation3 [shape = 's32[1]{0}', space=sflag, size = 0x4, scoped, tag = 'scoped memory for tpu_custom_call.1']
    #allocation4 [shape = 's32[1]{0}', space=sflag, size = 0x4, scoped, tag = 'scoped memory for tpu_custom_call.1']
    #allocation5 [shape = 'u8[32768]{0}', space=vmem, size = 0x8000, scoped, tag = 'input window, operand 1, single buffered']
    #allocation6 [shape = 's32[1]{0}', space=sflag, size = 0x4, scoped, tag = 'scoped memory for tpu_custom_call.1']
    #allocation7 [shape = 'u8[32768]{0}', space=vmem, size = 0x8000, scoped, tag = 'input window, operand 3, single buffered']
    #allocation8 [shape = 'u8[32768]{0}', space=vmem, size = 0x8000, scoped, tag = 'input window, operand 5, single buffered']
    #allocation9 [shape = 's32[1]{0}', space=sflag, size = 0x4, scoped, tag = 'scoped memory for tpu_custom_call.1']
    #allocation10 [shape = 'u8[8192]{0}', space=vmem, size = 0x2000, scoped, tag = 'output window, operand 0, single buffered']
    %12 = vsyncpa [#allocation3], 0
    %13 = vsyncpa [#allocation6], 0
    %14 = vsyncpa [#allocation9], 0
    %15 = vsyncpa [#allocation4], 0
    // Predicated region
    $region2: #{tpu_custom_call.1} parent=1 // pred_check
      _
    $region3: #{tpu_custom_call.1} parent=1 // pred_check_branch
      %17 = sbr.rel (0) target = $region5
    $region4: #{tpu_custom_call.1} parent=1 // pred_region
      %s19 = ssub.s32 128, 128
      %20 = vsyncadd [#allocation3], %s19
      %s21 = sshll.u32 [#allocation2], 4
      %s22 = int_to_ptr.vmem [resolvable:$true] %s21
      %27 = dma.hbm_to_vmem [thread:$0]  %s0, 128, %s22, [#allocation3], 64, 64, 4
    $region5: #{tpu_custom_call.1} parent=1 // pred_fallthru
      _
    // Predicated region
    $region6: #{tpu_custom_call.1} parent=1 // pred_check
      _
    $region7: #{tpu_custom_call.1} parent=1 // pred_check_branch
      %29 = sbr.rel (0) target = $region9
    $region8: #{tpu_custom_call.1} parent=1 // pred_region
      %s31 = ssub.s32 1024, 1024
      %32 = vsyncadd [#allocation6], %s31
      %s33 = sshll.u32 [#allocation5], 4
      %s34 = int_to_ptr.vmem [resolvable:$true] %s33
      %39 = dma.hbm_to_vmem [thread:$0]  %s1, 1024, %s34, [#allocation6], 64, 64, 4
    $region9: #{tpu_custom_call.1} parent=1 // pred_fallthru
      _
    // Predicated region
    $region10: #{tpu_custom_call.1} parent=1 // pred_check
      _
    $region11: #{tpu_custom_call.1} parent=1 // pred_check_branch
      %41 = sbr.rel (0) target = $region13
    $region12: #{tpu_custom_call.1} parent=1 // pred_region
      _
    $region13: #{tpu_custom_call.1} parent=1 // pred_fallthru
      _
    // Predicated region
    $region14: #{tpu_custom_call.1} parent=1 // pred_check
      _
    $region15: #{tpu_custom_call.1} parent=1 // pred_check_branch
      %43 = sbr.rel (0) target = $region17
    $region16: #{tpu_custom_call.1} parent=1 // pred_region
      %s45 = ssub.s32 1024, 1024
      %46 = vsyncadd [#allocation6], %s45
      %s47 = sshll.u32 [#allocation7], 4
      %s48 = int_to_ptr.vmem [resolvable:$true] %s47
      %53 = dma.hbm_to_vmem [thread:$0]  %s3, 1024, %s48, [#allocation6], 64, 64, 4
    $region17: #{tpu_custom_call.1} parent=1 // pred_fallthru
      _
    // Predicated region
    $region18: #{tpu_custom_call.1} parent=1 // pred_check
      _
    $region19: #{tpu_custom_call.1} parent=1 // pred_check_branch
      %55 = sbr.rel (0) target = $region21
    $region20: #{tpu_custom_call.1} parent=1 // pred_region
      _
    $region21: #{tpu_custom_call.1} parent=1 // pred_fallthru
      _
    // Predicated region
    $region22: #{tpu_custom_call.1} parent=1 // pred_check
      _
    $region23: #{tpu_custom_call.1} parent=1 // pred_check_branch
      %57 = sbr.rel (0) target = $region25
    $region24: #{tpu_custom_call.1} parent=1 // pred_region
      %s59 = ssub.s32 1024, 1024
      %60 = vsyncadd [#allocation9], %s59
      %s61 = sshll.u32 [#allocation8], 4
      %s62 = int_to_ptr.vmem [resolvable:$true] %s61
      %67 = dma.hbm_to_vmem [thread:$0]  %s5, 1024, %s62, [#allocation9], 64, 64, 4
    $region25: #{tpu_custom_call.1} parent=1 // pred_fallthru
      _
    // Predicated region
    $region26: #{tpu_custom_call.1} parent=1 // pred_check
      _
    $region27: #{tpu_custom_call.1} parent=1 // pred_check_branch
      %69 = sbr.rel (0) target = $region29
    $region28: #{tpu_custom_call.1} parent=1 // pred_region
      _
    $region29: #{tpu_custom_call.1} parent=1 // pred_fallthru
      _
    // Predicated region
    $region30: #{tpu_custom_call.1} parent=1 // pred_check
      _
    $region31: #{tpu_custom_call.1} parent=1 // pred_check_branch
      %71 = sbr.rel (0) target = $region33
    $region32: #{tpu_custom_call.1} parent=1 // pred_region
      %72 = dma.done [#allocation3], 128
    $region33: #{tpu_custom_call.1} parent=1 // pred_fallthru
      _
    // Predicated region
    $region34: #{tpu_custom_call.1} parent=1 // pred_check
      _
    $region35: #{tpu_custom_call.1} parent=1 // pred_check_branch
      %74 = sbr.rel (0) target = $region37
    $region36: #{tpu_custom_call.1} parent=1 // pred_region
      %75 = dma.done [#allocation6], 1024
    $region37: #{tpu_custom_call.1} parent=1 // pred_fallthru
      _
    // Predicated region
    $region38: #{tpu_custom_call.1} parent=1 // pred_check
      _
    $region39: #{tpu_custom_call.1} parent=1 // pred_check_branch
      %77 = sbr.rel (0) target = $region41
    $region40: #{tpu_custom_call.1} parent=1 // pred_region
      %78 = dma.done [#allocation6], 1024
    $region41: #{tpu_custom_call.1} parent=1 // pred_fallthru
      _
    // Predicated region
    $region42: #{tpu_custom_call.1} parent=1 // pred_check
      _
    $region43: #{tpu_custom_call.1} parent=1 // pred_check_branch
      %80 = sbr.rel (0) target = $region45
    $region44: #{tpu_custom_call.1} parent=1 // pred_region
      %81 = dma.done [#allocation9], 1024
    $region45: #{tpu_custom_call.1} parent=1 // pred_fallthru
      _
    %v83 = vld [vmem:[#allocation2] sm:$0xf]
    %v84 = vld [vmem:[#allocation2 + $0x4] sm:$0xf]
    %v85 = vld [vmem:[#allocation5] sm:$0xf]
    %v86 = vld [vmem:[#allocation5 + $0x4] sm:$0xf]
    %v87 = vld [vmem:[#allocation5 + $0x8] sm:$0xf]
    %v88 = vld [vmem:[#allocation5 + $0xc] sm:$0xf]
    %v89 = vld [vmem:[#allocation5 + $0x10] sm:$0xf]
    %v90 = vld [vmem:[#allocation5 + $0x14] sm:$0xf]
    %v91 = vld [vmem:[#allocation5 + $0x18] sm:$0xf]
    %v92 = vld [vmem:[#allocation5 + $0x1c] sm:$0xf]
    %v93 = vld [vmem:[#allocation5 + $0x20] sm:$0xf]
    %v94 = vld [vmem:[#allocation5 + $0x24] sm:$0xf]
    %v95 = vld [vmem:[#allocation5 + $0x28] sm:$0xf]
    %v96 = vld [vmem:[#allocation5 + $0x2c] sm:$0xf]
    %v97 = vld [vmem:[#allocation5 + $0x30] sm:$0xf]
    %v98 = vld [vmem:[#allocation5 + $0x34] sm:$0xf]
    %v99 = vld [vmem:[#allocation5 + $0x38] sm:$0xf]
    %v100 = vld [vmem:[#allocation5 + $0x3c] sm:$0xf]
    %v101 = vld [vmem:[%s2] sm:$0x1]
    %v103 = vlaneseq
    %v104 = vshrl.u32 %v103, 7
    %v105 = vsub.s32 0, %v104
    %v106 = vrot.slane %v101, %v105
    %v110 = vunpack.c.l.b16 %v83
    %v111 = vunpack.c.l.b16 %v84
    %v112 = vpack.c.b16 %v111, %v110
    %v130 = vunpack.c.l.b16 %v85
    %v131 = vunpack.c.l.b16 %v86
    %v132 = vunpack.c.l.b16 %v87
    %v133 = vunpack.c.l.b16 %v88
    %v134 = vunpack.c.l.b16 %v89
    %v135 = vunpack.c.l.b16 %v90
    %v136 = vunpack.c.l.b16 %v91
    %v137 = vunpack.c.l.b16 %v92
    %v138 = vunpack.c.l.b16 %v93
    %v139 = vunpack.c.l.b16 %v94
    %v140 = vunpack.c.l.b16 %v95
    %v141 = vunpack.c.l.b16 %v96
    %v142 = vunpack.c.l.b16 %v97
    %v143 = vunpack.c.l.b16 %v98
    %v144 = vunpack.c.l.b16 %v99
    %v145 = vunpack.c.l.b16 %v100
    %v146 = vpack.c.b16 %v131, %v130
    %v147 = vpack.c.b16 %v133, %v132
    %v148 = vpack.c.b16 %v135, %v134
    %v149 = vpack.c.b16 %v137, %v136
    %v150 = vpack.c.b16 %v139, %v138
    %v151 = vpack.c.b16 %v141, %v140
    %v152 = vpack.c.b16 %v143, %v142
    %v153 = vpack.c.b16 %v145, %v144
    %162 = vmatprep.subr.bf16.mxu0 0
    %163 = vmatpush1.bf16.msra.mxu0 %v146
    %164 = vmatprep.subr.bf16.mxu0 0
    %165 = vmatpush1.bf16.msra.mxu0 %v147
    %166 = vmatprep.subr.bf16.mxu0 0
    %167 = vmatpush1.bf16.msra.mxu0 %v148
    %168 = vmatprep.subr.bf16.mxu0 0
    %169 = vmatpush1.bf16.msra.mxu0 %v149
    %170 = vmatprep.subr.bf16.mxu0 0
    %171 = vmatpush1.bf16.msra.mxu0 %v150
    %172 = vmatprep.subr.bf16.mxu0 0
    %173 = vmatpush1.bf16.msra.mxu0 %v151
    %174 = vmatprep.subr.bf16.mxu0 0
    %175 = vmatpush1.bf16.msra.mxu0 %v152
    %176 = vmatprep.subr.bf16.mxu0 0
    %177 = vmatpush1.bf16.msra.mxu0 %v153
    %178 = vmatprep.subr.bf16.mxu0 0
    %179 = vmatpush1.bf16.msra.mxu0 0
    %180 = vmatprep.subr.bf16.mxu0 0
    %181 = vmatpush1.bf16.msra.mxu0 0
    %182 = vmatprep.subr.bf16.mxu0 0
    %183 = vmatpush1.bf16.msra.mxu0 0
    %184 = vmatprep.subr.bf16.mxu0 0
    %185 = vmatpush1.bf16.msra.mxu0 0
    %186 = vmatprep.subr.bf16.mxu0 0
    %187 = vmatpush1.bf16.msra.mxu0 0
    %188 = vmatprep.subr.bf16.mxu0 0
    %189 = vmatpush1.bf16.msra.mxu0 0
    %190 = vmatprep.subr.bf16.mxu0 0
    %191 = vmatpush1.bf16.msra.mxu0 0
    %192 = vmatprep.subr.bf16.mxu0 0
    %193 = vmatpush1.bf16.msra.mxu0 0
    %194 = vmatprep.mubr.bf16.mxu0 0
    %195 = vmatmul.mubr.bf16.gmra.mrb[0].mxu0 %v112
    %v196 = vpop.f32.mrb[0].mxu0
    %v197 = vadd.f32 %v106, %v196
    %v198 = vpop.f32.mrb[0].mxu0
    %v199 = vpop.f32.mrb[0].mxu0
    %v200 = vadd.f32 %v106, %v199
    %v201 = vpop.f32.mrb[0].mxu0
    %202 = vdwg.mxu0
    %v203 = vpack.c.bf16 %v200, %v197
    %v204 = vld [vmem:[#allocation7] sm:$0xf]
    %v205 = vld [vmem:[#allocation7 + $0x4] sm:$0xf]
    %v206 = vld [vmem:[#allocation7 + $0x8] sm:$0xf]
    %v207 = vld [vmem:[#allocation7 + $0xc] sm:$0xf]
    %v208 = vld [vmem:[#allocation7 + $0x10] sm:$0xf]
    %v209 = vld [vmem:[#allocation7 + $0x14] sm:$0xf]
    %v210 = vld [vmem:[#allocation7 + $0x18] sm:$0xf]
    %v211 = vld [vmem:[#allocation7 + $0x1c] sm:$0xf]
    %v212 = vld [vmem:[#allocation7 + $0x20] sm:$0xf]
    %v213 = vld [vmem:[#allocation7 + $0x24] sm:$0xf]
    %v214 = vld [vmem:[#allocation7 + $0x28] sm:$0xf]
    %v215 = vld [vmem:[#allocation7 + $0x2c] sm:$0xf]
    %v216 = vld [vmem:[#allocation7 + $0x30] sm:$0xf]
    %v217 = vld [vmem:[#allocation7 + $0x34] sm:$0xf]
    %v218 = vld [vmem:[#allocation7 + $0x38] sm:$0xf]
    %v219 = vld [vmem:[#allocation7 + $0x3c] sm:$0xf]
    %v220 = vld [vmem:[%s4] sm:$0x1]
    %v222 = vlaneseq
    %v223 = vshrl.u32 %v222, 7
    %v224 = vsub.s32 0, %v223
    %v225 = vrot.slane %v220, %v224
    %v243 = vunpack.c.l.b16 %v204
    %v244 = vunpack.c.l.b16 %v205
    %v245 = vunpack.c.l.b16 %v206
    %v246 = vunpack.c.l.b16 %v207
    %v247 = vunpack.c.l.b16 %v208
    %v248 = vunpack.c.l.b16 %v209
    %v249 = vunpack.c.l.b16 %v210
    %v250 = vunpack.c.l.b16 %v211
    %v251 = vunpack.c.l.b16 %v212
    %v252 = vunpack.c.l.b16 %v213
    %v253 = vunpack.c.l.b16 %v214
    %v254 = vunpack.c.l.b16 %v215
    %v255 = vunpack.c.l.b16 %v216
    %v256 = vunpack.c.l.b16 %v217
    %v257 = vunpack.c.l.b16 %v218
    %v258 = vunpack.c.l.b16 %v219
    %v259 = vpack.c.b16 %v244, %v243
    %v260 = vpack.c.b16 %v246, %v245
    %v261 = vpack.c.b16 %v248, %v247
    %v262 = vpack.c.b16 %v250, %v249
    %v263 = vpack.c.b16 %v252, %v251
    %v264 = vpack.c.b16 %v254, %v253
    %v265 = vpack.c.b16 %v256, %v255
    %v266 = vpack.c.b16 %v258, %v257
    %275 = vmatprep.subr.bf16.mxu0 0
    %276 = vmatpush1.bf16.msra.mxu0 %v259
    %277 = vmatprep.subr.bf16.mxu0 0
    %278 = vmatpush1.bf16.msra.mxu0 %v260
    %279 = vmatprep.subr.bf16.mxu0 0
    %280 = vmatpush1.bf16.msra.mxu0 %v261
    %281 = vmatprep.subr.bf16.mxu0 0
    %282 = vmatpush1.bf16.msra.mxu0 %v262
    %283 = vmatprep.subr.bf16.mxu0 0
    %284 = vmatpush1.bf16.msra.mxu0 %v263
    %285 = vmatprep.subr.bf16.mxu0 0
    %286 = vmatpush1.bf16.msra.mxu0 %v264
    %287 = vmatprep.subr.bf16.mxu0 0
    %288 = vmatpush1.bf16.msra.mxu0 %v265
    %289 = vmatprep.subr.bf16.mxu0 0
    %290 = vmatpush1.bf16.msra.mxu0 %v266
    %291 = vmatprep.subr.bf16.mxu0 0
    %292 = vmatpush1.bf16.msra.mxu0 0
    %293 = vmatprep.subr.bf16.mxu0 0
    %294 = vmatpush1.bf16.msra.mxu0 0
    %295 = vmatprep.subr.bf16.mxu0 0
    %296 = vmatpush1.bf16.msra.mxu0 0
    %297 = vmatprep.subr.bf16.mxu0 0
    %298 = vmatpush1.bf16.msra.mxu0 0
    %299 = vmatprep.subr.bf16.mxu0 0
    %300 = vmatpush1.bf16.msra.mxu0 0
    %301 = vmatprep.subr.bf16.mxu0 0
    %302 = vmatpush1.bf16.msra.mxu0 0
    %303 = vmatprep.subr.bf16.mxu0 0
    %304 = vmatpush1.bf16.msra.mxu0 0
    %305 = vmatprep.subr.bf16.mxu0 0
    %306 = vmatpush1.bf16.msra.mxu0 0
    %307 = vmatprep.mubr.bf16.mxu0 0
    %308 = vmatmul.mubr.bf16.gmra.mrb[0].mxu0 %v203
    %v309 = vpop.f32.mrb[0].mxu0
    %v310 = vadd.f32 %v225, %v309
    %v311 = vpop.f32.mrb[0].mxu0
    %v312 = vpop.f32.mrb[0].mxu0
    %v313 = vadd.f32 %v225, %v312
    %v314 = vpop.f32.mrb[0].mxu0
    %315 = vdwg.mxu0
    %v316 = vmax.f32 %v310, 0.0
    %v317 = vmax.f32 %v313, 0.0
    %v318 = vpack.c.bf16 %v317, %v316
    %v319 = vld [vmem:[#allocation8] sm:$0xf]
    %v320 = vld [vmem:[#allocation8 + $0x4] sm:$0xf]
    %v321 = vld [vmem:[#allocation8 + $0x8] sm:$0xf]
    %v322 = vld [vmem:[#allocation8 + $0xc] sm:$0xf]
    %v323 = vld [vmem:[#allocation8 + $0x10] sm:$0xf]
    %v324 = vld [vmem:[#allocation8 + $0x14] sm:$0xf]
    %v325 = vld [vmem:[#allocation8 + $0x18] sm:$0xf]
    %v326 = vld [vmem:[#allocation8 + $0x1c] sm:$0xf]
    %v327 = vld [vmem:[#allocation8 + $0x20] sm:$0xf]
    %v328 = vld [vmem:[#allocation8 + $0x24] sm:$0xf]
    %v329 = vld [vmem:[#allocation8 + $0x28] sm:$0xf]
    %v330 = vld [vmem:[#allocation8 + $0x2c] sm:$0xf]
    %v331 = vld [vmem:[#allocation8 + $0x30] sm:$0xf]
    %v332 = vld [vmem:[#allocation8 + $0x34] sm:$0xf]
    %v333 = vld [vmem:[#allocation8 + $0x38] sm:$0xf]
    %v334 = vld [vmem:[#allocation8 + $0x3c] sm:$0xf]
    %v335 = vld [vmem:[%s6] sm:$0x1]
    %v337 = vlaneseq
    %v338 = vshrl.u32 %v337, 7
    %v339 = vsub.s32 0, %v338
    %v340 = vrot.slane %v335, %v339
    %v358 = vunpack.c.l.b16 %v319
    %v359 = vunpack.c.l.b16 %v320
    %v360 = vunpack.c.l.b16 %v321
    %v361 = vunpack.c.l.b16 %v322
    %v362 = vunpack.c.l.b16 %v323
    %v363 = vunpack.c.l.b16 %v324
    %v364 = vunpack.c.l.b16 %v325
    %v365 = vunpack.c.l.b16 %v326
    %v366 = vunpack.c.l.b16 %v327
    %v367 = vunpack.c.l.b16 %v328
    %v368 = vunpack.c.l.b16 %v329
    %v369 = vunpack.c.l.b16 %v330
    %v370 = vunpack.c.l.b16 %v331
    %v371 = vunpack.c.l.b16 %v332
    %v372 = vunpack.c.l.b16 %v333
    %v373 = vunpack.c.l.b16 %v334
    %v374 = vpack.c.b16 %v359, %v358
    %v375 = vpack.c.b16 %v361, %v360
    %v376 = vpack.c.b16 %v363, %v362
    %v377 = vpack.c.b16 %v365, %v364
    %v378 = vpack.c.b16 %v367, %v366
    %v379 = vpack.c.b16 %v369, %v368
    %v380 = vpack.c.b16 %v371, %v370
    %v381 = vpack.c.b16 %v373, %v372
    %390 = vmatprep.subr.bf16.mxu0 0
    %391 = vmatpush1.bf16.msra.mxu0 %v374
    %392 = vmatprep.subr.bf16.mxu0 0
    %393 = vmatpush1.bf16.msra.mxu0 %v375
    %394 = vmatprep.subr.bf16.mxu0 0
    %395 = vmatpush1.bf16.msra.mxu0 %v376
    %396 = vmatprep.subr.bf16.mxu0 0
    %397 = vmatpush1.bf16.msra.mxu0 %v377
    %398 = vmatprep.subr.bf16.mxu0 0
    %399 = vmatpush1.bf16.msra.mxu0 %v378
    %400 = vmatprep.subr.bf16.mxu0 0
    %401 = vmatpush1.bf16.msra.mxu0 %v379
    %402 = vmatprep.subr.bf16.mxu0 0
    %403 = vmatpush1.bf16.msra.mxu0 %v380
    %404 = vmatprep.subr.bf16.mxu0 0
    %405 = vmatpush1.bf16.msra.mxu0 %v381
    %406 = vmatprep.subr.bf16.mxu0 0
    %407 = vmatpush1.bf16.msra.mxu0 0
    %408 = vmatprep.subr.bf16.mxu0 0
    %409 = vmatpush1.bf16.msra.mxu0 0
    %410 = vmatprep.subr.bf16.mxu0 0
    %411 = vmatpush1.bf16.msra.mxu0 0
    %412 = vmatprep.subr.bf16.mxu0 0
    %413 = vmatpush1.bf16.msra.mxu0 0
    %414 = vmatprep.subr.bf16.mxu0 0
    %415 = vmatpush1.bf16.msra.mxu0 0
    %416 = vmatprep.subr.bf16.mxu0 0
    %417 = vmatpush1.bf16.msra.mxu0 0
    %418 = vmatprep.subr.bf16.mxu0 0
    %419 = vmatpush1.bf16.msra.mxu0 0
    %420 = vmatprep.subr.bf16.mxu0 0
    %421 = vmatpush1.bf16.msra.mxu0 0
    %422 = vmatprep.mubr.bf16.mxu0 0
    %423 = vmatmul.mubr.bf16.gmra.mrb[0].mxu0 %v318
    %v424 = vpop.f32.mrb[0].mxu0
    %v425 = vadd.f32 %v340, %v424
    %v426 = vpop.f32.mrb[0].mxu0
    %v427 = vpop.f32.mrb[0].mxu0
    %v428 = vadd.f32 %v340, %v427
    %v429 = vpop.f32.mrb[0].mxu0
    %430 = vdwg.mxu0
    %431 = vst [vmem:[#allocation10] sm:$0xff] %v425
    %432 = vst [vmem:[#allocation10 + $0x8] sm:$0xff] %v428
    // Predicated region
    $region46: #{tpu_custom_call.1} parent=1 // pred_check
      _
    $region47: #{tpu_custom_call.1} parent=1 // pred_check_branch
      %434 = sbr.rel (0) target = $region49
    $region48: #{tpu_custom_call.1} parent=1 // pred_region
      %s436 = ssub.s32 256, 256
      %437 = vsyncadd [#allocation4], %s436
      %s438 = sshll.u32 [#allocation10], 4
      %s439 = int_to_ptr.vmem [resolvable:$true] %s438
      %444 = dma.vmem_to_hbm [thread:$0]  %s439, 256, %s7, [#allocation4], 128, 128, 8
    $region49: #{tpu_custom_call.1} parent=1 // pred_fallthru
      _
    // Predicated region
    $region50: #{tpu_custom_call.1} parent=1 // pred_check
      _
    $region51: #{tpu_custom_call.1} parent=1 // pred_check_branch
      %446 = sbr.rel (0) target = $region53
    $region52: #{tpu_custom_call.1} parent=1 // pred_region
      %447 = dma.done [#allocation4], 256
    $region53: #{tpu_custom_call.1} parent=1 // pred_fallthru
      _
    %448 = vsyncpa [#allocation3], 1
    %449 = vsyncpa [#allocation6], 1
    %450 = vsyncpa [#allocation9], 1
    %451 = vsyncpa [#allocation4], 1

// kernel: tpu_custom_call.1
$region0: #{tpu_custom_call.1}
  #allocation0 [shape = 'u32[]', space=smem, size = 0x4, offset = 0x4, fixed_abs, tag = 'smem constant byte address 0x4 - core index']
  #allocation1 [shape = 'u32[144,128]{1,0:T(1,128)}', space=vmem, size = 0x12000, scoped, tag = 'internal scratch']
  %s0 = inlined_call_operand.hbm [shape: bf16[16,128], index: 0, kind: input, shape index: {}]
  %s1 = inlined_call_operand.hbm [shape: bf16[128,128], index: 1, kind: input, shape index: {}]
  %s2 = inlined_call_operand.vmem [shape: f32[1,128], index: 2, kind: input, shape index: {}]
  %s3 = inlined_call_operand.hbm [shape: bf16[128,128], index: 3, kind: input, shape index: {}]
  %s4 = inlined_call_operand.vmem [shape: f32[1,128], index: 4, kind: input, shape index: {}]
  %s5 = inlined_call_operand.hbm [shape: bf16[128,128], index: 5, kind: input, shape index: {}]
  %s6 = inlined_call_operand.vmem [shape: f32[1,128], index: 6, kind: input, shape index: {}]
  %s7 = inlined_call_operand.hbm [shape: f32[16,128], index: 7, kind: output, shape index: {}]
  %s8 = sld [smem:[#allocation0]]
  $region54: #{tpu_custom_call.1} parent=0
    _
  %s10 = ssub.s32 1, %s8
  %s11 = scalar_select 0, %s10, %s8
  $region1: #{tpu_custom_call.1} parent=0
    #allocation2 [shape = 'u8[4096]{0}', space=vmem, size = 0x1000, scoped, tag = 'input window, operand 0, single buffered']
    #allocation3 [shape = 's32[1]{0}', space=sflag, size = 0x4, scoped, tag = 'scoped memory for tpu_custom_call.1']
    #allocation4 [shape = 's32[1]{0}', space=sflag, size = 0x4, scoped, tag = 'scoped memory for tpu_custom_call.1']
    #allocation5 [shape = 'u8[32768]{0}', space=vmem, size = 0x8000, scoped, tag = 'input window, operand 1, single buffered']
    #allocation6 [shape = 's32[1]{0}', space=sflag, size = 0x4, scoped, tag = 'scoped memory for tpu_custom_call.1']
    #allocation7 [shape = 'u8[32768]{0}', space=vmem, size = 0x8000, scoped, tag = 'input window, operand 3, single buffered']
    #allocation8 [shape = 'u8[32768]{0}', space=vmem, size = 0x8000, scoped, tag = 'input window, operand 5, single buffered']
    #allocation9 [shape = 's32[1]{0}', space=sflag, size = 0x4, scoped, tag = 'scoped memory for tpu_custom_call.1']
    #allocation10 [shape = 'u8[8192]{0}', space=vmem, size = 0x2000, scoped, tag = 'output window, operand 0, single buffered']
    %12 = vsyncpa [#allocation3], 0
    %13 = vsyncpa [#allocation6], 0
    %14 = vsyncpa [#allocation9], 0
    %15 = vsyncpa [#allocation4], 0
    // Predicated region
    $region2: #{tpu_custom_call.1} parent=1 // pred_check
      _
    $region3: #{tpu_custom_call.1} parent=1 // pred_check_branch
      %17 = sbr.rel (0) target = $region5
    $region4: #{tpu_custom_call.1} parent=1 // pred_region
      %s19 = ssub.s32 128, 128
      %20 = vsyncadd [#allocation3], %s19
      %s21 = sshll.u32 [#allocation2], 4
      %s22 = int_to_ptr.vmem [resolvable:$true] %s21
      %27 = dma.hbm_to_vmem [thread:$0]  %s0, 128, %s22, [#allocation3], 64, 64, 4
    $region5: #{tpu_custom_call.1} parent=1 // pred_fallthru
      _
    // Predicated region
    $region6: #{tpu_custom_call.1} parent=1 // pred_check
      _
    $region7: #{tpu_custom_call.1} parent=1 // pred_check_branch
      %29 = sbr.rel (0) target = $region9
    $region8: #{tpu_custom_call.1} parent=1 // pred_region
      %s31 = ssub.s32 1024, 1024
      %32 = vsyncadd [#allocation6], %s31
      %s33 = sshll.u32 [#allocation5], 4
      %s34 = int_to_ptr.vmem [resolvable:$true] %s33
      %39 = dma.hbm_to_vmem [thread:$0]  %s1, 1024, %s34, [#allocation6], 64, 64, 4
    $region9: #{tpu_custom_call.1} parent=1 // pred_fallthru
      _
    // Predicated region
    $region10: #{tpu_custom_call.1} parent=1 // pred_check
      _
    $region11: #{tpu_custom_call.1} parent=1 // pred_check_branch
      %41 = sbr.rel (0) target = $region13
    $region12: #{tpu_custom_call.1} parent=1 // pred_region
      _
    $region13: #{tpu_custom_call.1} parent=1 // pred_fallthru
      _
    // Predicated region
    $region14: #{tpu_custom_call.1} parent=1 // pred_check
      _
    $region15: #{tpu_custom_call.1} parent=1 // pred_check_branch
      %43 = sbr.rel (0) target = $region17
    $region16: #{tpu_custom_call.1} parent=1 // pred_region
      %s45 = ssub.s32 1024, 1024
      %46 = vsyncadd [#allocation6], %s45
      %s47 = sshll.u32 [#allocation7], 4
      %s48 = int_to_ptr.vmem [resolvable:$true] %s47
      %53 = dma.hbm_to_vmem [thread:$0]  %s3, 1024, %s48, [#allocation6], 64, 64, 4
    $region17: #{tpu_custom_call.1} parent=1 // pred_fallthru
      _
    // Predicated region
    $region18: #{tpu_custom_call.1} parent=1 // pred_check
      _
    $region19: #{tpu_custom_call.1} parent=1 // pred_check_branch
      %55 = sbr.rel (0) target = $region21
    $region20: #{tpu_custom_call.1} parent=1 // pred_region
      _
    $region21: #{tpu_custom_call.1} parent=1 // pred_fallthru
      _
    // Predicated region
    $region22: #{tpu_custom_call.1} parent=1 // pred_check
      _
    $region23: #{tpu_custom_call.1} parent=1 // pred_check_branch
      %57 = sbr.rel (0) target = $region25
    $region24: #{tpu_custom_call.1} parent=1 // pred_region
      %s59 = ssub.s32 1024, 1024
      %60 = vsyncadd [#allocation9], %s59
      %s61 = sshll.u32 [#allocation8], 4
      %s62 = int_to_ptr.vmem [resolvable:$true] %s61
      %67 = dma.hbm_to_vmem [thread:$0]  %s5, 1024, %s62, [#allocation9], 64, 64, 4
    $region25: #{tpu_custom_call.1} parent=1 // pred_fallthru
      _
    // Predicated region
    $region26: #{tpu_custom_call.1} parent=1 // pred_check
      _
    $region27: #{tpu_custom_call.1} parent=1 // pred_check_branch
      %69 = sbr.rel (0) target = $region29
    $region28: #{tpu_custom_call.1} parent=1 // pred_region
      _
    $region29: #{tpu_custom_call.1} parent=1 // pred_fallthru
      _
    // Predicated region
    $region30: #{tpu_custom_call.1} parent=1 // pred_check
      _
    $region31: #{tpu_custom_call.1} parent=1 // pred_check_branch
      %71 = sbr.rel (0) target = $region33
    $region32: #{tpu_custom_call.1} parent=1 // pred_region
      %72 = dma.done [#allocation3], 128
    $region33: #{tpu_custom_call.1} parent=1 // pred_fallthru
      _
    // Predicated region
    $region34: #{tpu_custom_call.1} parent=1 // pred_check
      _
    $region35: #{tpu_custom_call.1} parent=1 // pred_check_branch
      %74 = sbr.rel (0) target = $region37
    $region36: #{tpu_custom_call.1} parent=1 // pred_region
      %75 = dma.done [#allocation6], 1024
    $region37: #{tpu_custom_call.1} parent=1 // pred_fallthru
      _
    // Predicated region
    $region38: #{tpu_custom_call.1} parent=1 // pred_check
      _
    $region39: #{tpu_custom_call.1} parent=1 // pred_check_branch
      %77 = sbr.rel (0) target = $region41
    $region40: #{tpu_custom_call.1} parent=1 // pred_region
      %78 = dma.done [#allocation6], 1024
    $region41: #{tpu_custom_call.1} parent=1 // pred_fallthru
      _
    // Predicated region
    $region42: #{tpu_custom_call.1} parent=1 // pred_check
      _
    $region43: #{tpu_custom_call.1} parent=1 // pred_check_branch
      %80 = sbr.rel (0) target = $region45
    $region44: #{tpu_custom_call.1} parent=1 // pred_region
      %81 = dma.done [#allocation9], 1024
    $region45: #{tpu_custom_call.1} parent=1 // pred_fallthru
      _
    %v83 = vld [vmem:[#allocation2] sm:$0xf]
    %v84 = vld [vmem:[#allocation2 + $0x4] sm:$0xf]
    %v85 = vld [vmem:[#allocation5] sm:$0xf]
    %v86 = vld [vmem:[#allocation5 + $0x4] sm:$0xf]
    %v87 = vld [vmem:[#allocation5 + $0x8] sm:$0xf]
    %v88 = vld [vmem:[#allocation5 + $0xc] sm:$0xf]
    %v89 = vld [vmem:[#allocation5 + $0x10] sm:$0xf]
    %v90 = vld [vmem:[#allocation5 + $0x14] sm:$0xf]
    %v91 = vld [vmem:[#allocation5 + $0x18] sm:$0xf]
    %v92 = vld [vmem:[#allocation5 + $0x1c] sm:$0xf]
    %v93 = vld [vmem:[#allocation5 + $0x20] sm:$0xf]
    %v94 = vld [vmem:[#allocation5 + $0x24] sm:$0xf]
    %v95 = vld [vmem:[#allocation5 + $0x28] sm:$0xf]
    %v96 = vld [vmem:[#allocation5 + $0x2c] sm:$0xf]
    %v97 = vld [vmem:[#allocation5 + $0x30] sm:$0xf]
    %v98 = vld [vmem:[#allocation5 + $0x34] sm:$0xf]
    %v99 = vld [vmem:[#allocation5 + $0x38] sm:$0xf]
    %v100 = vld [vmem:[#allocation5 + $0x3c] sm:$0xf]
    %v101 = vld [vmem:[%s2] sm:$0x1]
    %v103 = vlaneseq
    %v104 = vshrl.u32 %v103, 7
    %v105 = vsub.s32 0, %v104
    %v106 = vrot.slane %v101, %v105
    %v110 = vunpack.c.l.b16 %v83
    %v111 = vunpack.c.l.b16 %v84
    %v112 = vpack.c.b16 %v111, %v110
    %v130 = vunpack.c.l.b16 %v85
    %v131 = vunpack.c.l.b16 %v86
    %v132 = vunpack.c.l.b16 %v87
    %v133 = vunpack.c.l.b16 %v88
    %v134 = vunpack.c.l.b16 %v89
    %v135 = vunpack.c.l.b16 %v90
    %v136 = vunpack.c.l.b16 %v91
    %v137 = vunpack.c.l.b16 %v92
    %v138 = vunpack.c.l.b16 %v93
    %v139 = vunpack.c.l.b16 %v94
    %v140 = vunpack.c.l.b16 %v95
    %v141 = vunpack.c.l.b16 %v96
    %v142 = vunpack.c.l.b16 %v97
    %v143 = vunpack.c.l.b16 %v98
    %v144 = vunpack.c.l.b16 %v99
    %v145 = vunpack.c.l.b16 %v100
    %v146 = vpack.c.b16 %v131, %v130
    %v147 = vpack.c.b16 %v133, %v132
    %v148 = vpack.c.b16 %v135, %v134
    %v149 = vpack.c.b16 %v137, %v136
    %v150 = vpack.c.b16 %v139, %v138
    %v151 = vpack.c.b16 %v141, %v140
    %v152 = vpack.c.b16 %v143, %v142
    %v153 = vpack.c.b16 %v145, %v144
    %162 = vmatprep.subr.bf16.mxu0 0
    %163 = vmatpush1.bf16.msra.mxu0 %v146
    %164 = vmatprep.subr.bf16.mxu0 0
    %165 = vmatpush1.bf16.msra.mxu0 %v147
    %166 = vmatprep.subr.bf16.mxu0 0
    %167 = vmatpush1.bf16.msra.mxu0 %v148
    %168 = vmatprep.subr.bf16.mxu0 0
    %169 = vmatpush1.bf16.msra.mxu0 %v149
    %170 = vmatprep.subr.bf16.mxu0 0
    %171 = vmatpush1.bf16.msra.mxu0 %v150
    %172 = vmatprep.subr.bf16.mxu0 0
    %173 = vmatpush1.bf16.msra.mxu0 %v151
    %174 = vmatprep.subr.bf16.mxu0 0
    %175 = vmatpush1.bf16.msra.mxu0 %v152
    %176 = vmatprep.subr.bf16.mxu0 0
    %177 = vmatpush1.bf16.msra.mxu0 %v153
    %178 = vmatprep.subr.bf16.mxu0 0
    %179 = vmatpush1.bf16.msra.mxu0 0
    %180 = vmatprep.subr.bf16.mxu0 0
    %181 = vmatpush1.bf16.msra.mxu0 0
    %182 = vmatprep.subr.bf16.mxu0 0
    %183 = vmatpush1.bf16.msra.mxu0 0
    %184 = vmatprep.subr.bf16.mxu0 0
    %185 = vmatpush1.bf16.msra.mxu0 0
    %186 = vmatprep.subr.bf16.mxu0 0
    %187 = vmatpush1.bf16.msra.mxu0 0
    %188 = vmatprep.subr.bf16.mxu0 0
    %189 = vmatpush1.bf16.msra.mxu0 0
    %190 = vmatprep.subr.bf16.mxu0 0
    %191 = vmatpush1.bf16.msra.mxu0 0
    %192 = vmatprep.subr.bf16.mxu0 0
    %193 = vmatpush1.bf16.msra.mxu0 0
    %194 = vmatprep.mubr.bf16.mxu0 0
    %195 = vmatmul.mubr.bf16.gmra.mrb[0].mxu0 %v112
    %v196 = vpop.f32.mrb[0].mxu0
    %v197 = vadd.f32 %v106, %v196
    %v198 = vpop.f32.mrb[0].mxu0
    %v199 = vpop.f32.mrb[0].mxu0
    %v200 = vadd.f32 %v106, %v199
    %v201 = vpop.f32.mrb[0].mxu0
    %202 = vdwg.mxu0
    %v203 = vpack.c.bf16 %v200, %v197
    %v204 = vld [vmem:[#allocation7] sm:$0xf]
    %v205 = vld [vmem:[#allocation7 + $0x4] sm:$0xf]
    %v206 = vld [vmem:[#allocation7 + $0x8] sm:$0xf]
    %v207 = vld [vmem:[#allocation7 + $0xc] sm:$0xf]
    %v208 = vld [vmem:[#allocation7 + $0x10] sm:$0xf]
    %v209 = vld [vmem:[#allocation7 + $0x14] sm:$0xf]
    %v210 = vld [vmem:[#allocation7 + $0x18] sm:$0xf]
    %v211 = vld [vmem:[#allocation7 + $0x1c] sm:$0xf]
    %v212 = vld [vmem:[#allocation7 + $0x20] sm:$0xf]
    %v213 = vld [vmem:[#allocation7 + $0x24] sm:$0xf]
    %v214 = vld [vmem:[#allocation7 + $0x28] sm:$0xf]
    %v215 = vld [vmem:[#allocation7 + $0x2c] sm:$0xf]
    %v216 = vld [vmem:[#allocation7 + $0x30] sm:$0xf]
    %v217 = vld [vmem:[#allocation7 + $0x34] sm:$0xf]
    %v218 = vld [vmem:[#allocation7 + $0x38] sm:$0xf]
    %v219 = vld [vmem:[#allocation7 + $0x3c] sm:$0xf]
    %v220 = vld [vmem:[%s4] sm:$0x1]
    %v222 = vlaneseq
    %v223 = vshrl.u32 %v222, 7
    %v224 = vsub.s32 0, %v223
    %v225 = vrot.slane %v220, %v224
    %v243 = vunpack.c.l.b16 %v204
    %v244 = vunpack.c.l.b16 %v205
    %v245 = vunpack.c.l.b16 %v206
    %v246 = vunpack.c.l.b16 %v207
    %v247 = vunpack.c.l.b16 %v208
    %v248 = vunpack.c.l.b16 %v209
    %v249 = vunpack.c.l.b16 %v210
    %v250 = vunpack.c.l.b16 %v211
    %v251 = vunpack.c.l.b16 %v212
    %v252 = vunpack.c.l.b16 %v213
    %v253 = vunpack.c.l.b16 %v214
    %v254 = vunpack.c.l.b16 %v215
    %v255 = vunpack.c.l.b16 %v216
    %v256 = vunpack.c.l.b16 %v217
    %v257 = vunpack.c.l.b16 %v218
    %v258 = vunpack.c.l.b16 %v219
    %v259 = vpack.c.b16 %v244, %v243
    %v260 = vpack.c.b16 %v246, %v245
    %v261 = vpack.c.b16 %v248, %v247
    %v262 = vpack.c.b16 %v250, %v249
    %v263 = vpack.c.b16 %v252, %v251
    %v264 = vpack.c.b16 %v254, %v253
    %v265 = vpack.c.b16 %v256, %v255
    %v266 = vpack.c.b16 %v258, %v257
    %275 = vmatprep.subr.bf16.mxu0 0
    %276 = vmatpush1.bf16.msra.mxu0 %v259
    %277 = vmatprep.subr.bf16.mxu0 0
    %278 = vmatpush1.bf16.msra.mxu0 %v260
    %279 = vmatprep.subr.bf16.mxu0 0
    %280 = vmatpush1.bf16.msra.mxu0 %v261
    %281 = vmatprep.subr.bf16.mxu0 0
    %282 = vmatpush1.bf16.msra.mxu0 %v262
    %283 = vmatprep.subr.bf16.mxu0 0
    %284 = vmatpush1.bf16.msra.mxu0 %v263
    %285 = vmatprep.subr.bf16.mxu0 0
    %286 = vmatpush1.bf16.msra.mxu0 %v264
    %287 = vmatprep.subr.bf16.mxu0 0
    %288 = vmatpush1.bf16.msra.mxu0 %v265
    %289 = vmatprep.subr.bf16.mxu0 0
    %290 = vmatpush1.bf16.msra.mxu0 %v266
    %291 = vmatprep.subr.bf16.mxu0 0
    %292 = vmatpush1.bf16.msra.mxu0 0
    %293 = vmatprep.subr.bf16.mxu0 0
    %294 = vmatpush1.bf16.msra.mxu0 0
    %295 = vmatprep.subr.bf16.mxu0 0
    %296 = vmatpush1.bf16.msra.mxu0 0
    %297 = vmatprep.subr.bf16.mxu0 0
    %298 = vmatpush1.bf16.msra.mxu0 0
    %299 = vmatprep.subr.bf16.mxu0 0
    %300 = vmatpush1.bf16.msra.mxu0 0
    %301 = vmatprep.subr.bf16.mxu0 0
    %302 = vmatpush1.bf16.msra.mxu0 0
    %303 = vmatprep.subr.bf16.mxu0 0
    %304 = vmatpush1.bf16.msra.mxu0 0
    %305 = vmatprep.subr.bf16.mxu0 0
    %306 = vmatpush1.bf16.msra.mxu0 0
    %307 = vmatprep.mubr.bf16.mxu0 0
    %308 = vmatmul.mubr.bf16.gmra.mrb[0].mxu0 %v203
    %v309 = vpop.f32.mrb[0].mxu0
    %v310 = vadd.f32 %v225, %v309
    %v311 = vpop.f32.mrb[0].mxu0
    %v312 = vpop.f32.mrb[0].mxu0
    %v313 = vadd.f32 %v225, %v312
    %v314 = vpop.f32.mrb[0].mxu0
    %315 = vdwg.mxu0
    %v316 = vmax.f32 %v310, 0.0
    %v317 = vmax.f32 %v313, 0.0
    %v318 = vpack.c.bf16 %v317, %v316
    %v319 = vld [vmem:[#allocation8] sm:$0xf]
    %v320 = vld [vmem:[#allocation8 + $0x4] sm:$0xf]
    %v321 = vld [vmem:[#allocation8 + $0x8] sm:$0xf]
    %v322 = vld [vmem:[#allocation8 + $0xc] sm:$0xf]
    %v323 = vld [vmem:[#allocation8 + $0x10] sm:$0xf]
    %v324 = vld [vmem:[#allocation8 + $0x14] sm:$0xf]
    %v325 = vld [vmem:[#allocation8 + $0x18] sm:$0xf]
    %v326 = vld [vmem:[#allocation8 + $0x1c] sm:$0xf]
    %v327 = vld [vmem:[#allocation8 + $0x20] sm:$0xf]
    %v328 = vld [vmem:[#allocation8 + $0x24] sm:$0xf]
    %v329 = vld [vmem:[#allocation8 + $0x28] sm:$0xf]
    %v330 = vld [vmem:[#allocation8 + $0x2c] sm:$0xf]
    %v331 = vld [vmem:[#allocation8 + $0x30] sm:$0xf]
    %v332 = vld [vmem:[#allocation8 + $0x34] sm:$0xf]
    %v333 = vld [vmem:[#allocation8 + $0x38] sm:$0xf]
    %v334 = vld [vmem:[#allocation8 + $0x3c] sm:$0xf]
    %v335 = vld [vmem:[%s6] sm:$0x1]
    %v337 = vlaneseq
    %v338 = vshrl.u32 %v337, 7
    %v339 = vsub.s32 0, %v338
    %v340 = vrot.slane %v335, %v339
    %v358 = vunpack.c.l.b16 %v319
    %v359 = vunpack.c.l.b16 %v320
    %v360 = vunpack.c.l.b16 %v321
    %v361 = vunpack.c.l.b16 %v322
    %v362 = vunpack.c.l.b16 %v323
    %v363 = vunpack.c.l.b16 %v324
    %v364 = vunpack.c.l.b16 %v325
    %v365 = vunpack.c.l.b16 %v326
    %v366 = vunpack.c.l.b16 %v327
    %v367 = vunpack.c.l.b16 %v328
    %v368 = vunpack.c.l.b16 %v329
    %v369 = vunpack.c.l.b16 %v330
    %v370 = vunpack.c.l.b16 %v331
    %v371 = vunpack.c.l.b16 %v332
    %v372 = vunpack.c.l.b16 %v333
    %v373 = vunpack.c.l.b16 %v334
    %v374 = vpack.c.b16 %v359, %v358
    %v375 = vpack.c.b16 %v361, %v360
    %v376 = vpack.c.b16 %v363, %v362
    %v377 = vpack.c.b16 %v365, %v364
    %v378 = vpack.c.b16 %v367, %v366
    %v379 = vpack.c.b16 %v369, %v368
    %v380 = vpack.c.b16 %v371, %v370
    %v381 = vpack.c.b16 %v373, %v372
    %390 = vmatprep.subr.bf16.mxu0 0
    %391 = vmatpush1.bf16.msra.mxu0 %v374
    %392 = vmatprep.subr.bf16.mxu0 0
    %393 = vmatpush1.bf16.msra.mxu0 %v375
    %394 = vmatprep.subr.bf16.mxu0 0
    %395 = vmatpush1.bf16.msra.mxu0 %v376
    %396 = vmatprep.subr.bf16.mxu0 0
    %397 = vmatpush1.bf16.msra.mxu0 %v377
    %398 = vmatprep.subr.bf16.mxu0 0
    %399 = vmatpush1.bf16.msra.mxu0 %v378
    %400 = vmatprep.subr.bf16.mxu0 0
    %401 = vmatpush1.bf16.msra.mxu0 %v379
    %402 = vmatprep.subr.bf16.mxu0 0
    %403 = vmatpush1.bf16.msra.mxu0 %v380
    %404 = vmatprep.subr.bf16.mxu0 0
    %405 = vmatpush1.bf16.msra.mxu0 %v381
    %406 = vmatprep.subr.bf16.mxu0 0
    %407 = vmatpush1.bf16.msra.mxu0 0
    %408 = vmatprep.subr.bf16.mxu0 0
    %409 = vmatpush1.bf16.msra.mxu0 0
    %410 = vmatprep.subr.bf16.mxu0 0
    %411 = vmatpush1.bf16.msra.mxu0 0
    %412 = vmatprep.subr.bf16.mxu0 0
    %413 = vmatpush1.bf16.msra.mxu0 0
    %414 = vmatprep.subr.bf16.mxu0 0
    %415 = vmatpush1.bf16.msra.mxu0 0
    %416 = vmatprep.subr.bf16.mxu0 0
    %417 = vmatpush1.bf16.msra.mxu0 0
    %418 = vmatprep.subr.bf16.mxu0 0
    %419 = vmatpush1.bf16.msra.mxu0 0
    %420 = vmatprep.subr.bf16.mxu0 0
    %421 = vmatpush1.bf16.msra.mxu0 0
    %422 = vmatprep.mubr.bf16.mxu0 0
    %423 = vmatmul.mubr.bf16.gmra.mrb[0].mxu0 %v318
    %v424 = vpop.f32.mrb[0].mxu0
    %v425 = vadd.f32 %v340, %v424
    %v426 = vpop.f32.mrb[0].mxu0
    %v427 = vpop.f32.mrb[0].mxu0
    %v428 = vadd.f32 %v340, %v427
    %v429 = vpop.f32.mrb[0].mxu0
    %430 = vdwg.mxu0
    %431 = vst [vmem:[#allocation10] sm:$0xff] %v425
    %432 = vst [vmem:[#allocation10 + $0x8] sm:$0xff] %v428
    // Predicated region
    $region46: #{tpu_custom_call.1} parent=1 // pred_check
      _
    $region47: #{tpu_custom_call.1} parent=1 // pred_check_branch
      %434 = sbr.rel (0) target = $region49
    $region48: #{tpu_custom_call.1} parent=1 // pred_region
      %s436 = ssub.s32 256, 256
      %437 = vsyncadd [#allocation4], %s436
      %s438 = sshll.u32 [#allocation10], 4
      %s439 = int_to_ptr.vmem [resolvable:$true] %s438
      %444 = dma.vmem_to_hbm [thread:$0]  %s439, 256, %s7, [#allocation4], 128, 128, 8
    $region49: #{tpu_custom_call.1} parent=1 // pred_fallthru
      _
    // Predicated region
    $region50: #{tpu_custom_call.1} parent=1 // pred_check
      _
    $region51: #{tpu_custom_call.1} parent=1 // pred_check_branch
      %446 = sbr.rel (0) target = $region53
    $region52: #{tpu_custom_call.1} parent=1 // pred_region
      %447 = dma.done [#allocation4], 256
    $region53: #{tpu_custom_call.1} parent=1 // pred_fallthru
      _
    %448 = vsyncpa [#allocation3], 1
    %449 = vsyncpa [#allocation6], 1
    %450 = vsyncpa [#allocation9], 1
    %451 = vsyncpa [#allocation4], 1

</llo_original>
